<compile_context>
chip_gen: v7x
topology: tpu7x:2x2x1
jax: 0.10.0
libtpu: 0.0.40
codegen_flags: <defaults>
</compile_context>

<pallas_src>
import math
import functools

import jax
import jax.numpy as jnp
from jax.experimental import pallas as pl
from jax.experimental.pallas import tpu as pltpu

SUBLANE_F32 = 8
SUBLANE_BF16 = 16


def _round_up(x, m):
    return ((x + m - 1) // m) * m


# ------------------------------------------------------------------ kernels
def _diffemb_precise_kernel(noise_ref, exp_ref, w1s_ref, w1c_ref, b1_ref,
                            w2_ref, b2_ref, out_ref):
    """Exact sin/cos feature stage; W1 is split so there is no in-kernel lane concat."""
    wdt = w1s_ref.dtype
    # x = (scale * noise) * exponents   (scale already folded into the noise tile)
    x = noise_ref[...] * exp_ref[...]                      # (tb,1)*(1,half) -> (tb,half)
    s = jnp.sin(x)
    c = jnp.cos(x)
    # projection1 as two accumulating MXU dots (== concat([sin, cos]) @ W1)
    h = jnp.dot(s.astype(wdt), w1s_ref[...], preferred_element_type=jnp.float32)
    h = h + jnp.dot(c.astype(wdt), w1c_ref[...], preferred_element_type=jnp.float32)
    h = h + b1_ref[...]
    h = h * jax.nn.sigmoid(h)                              # SiLU (f32: safe on v5e/v6e/v7x)
    o = jnp.dot(h.astype(wdt), w2_ref[...], preferred_element_type=jnp.float32) + b2_ref[...]
    out_ref[...] = (o * jax.nn.sigmoid(o)).astype(out_ref.dtype)


def _diffemb_fast_kernel(noise_ref, exp2_ref, phase_ref, w1_ref, b1_ref,
                         w2_ref, b2_ref, out_ref):
    """EUP-lean feature stage: cos(x) == sin(x + pi/2), so sin+cos collapse into one
    transcendental over the full (tb, n_channels) tile and projection1 is a single
    MXU dot.  Feature error ~1 ulp(x) at large arguments (see review caveat)."""
    wdt = w1_ref.dtype
    feat = jnp.sin(noise_ref[...] * exp2_ref[...] + phase_ref[...])   # (tb, n_channels)
    h = jnp.dot(feat.astype(wdt), w1_ref[...], preferred_element_type=jnp.float32) + b1_ref[...]
    h = h * jax.nn.sigmoid(h)
    o = jnp.dot(h.astype(wdt), w2_ref[...], preferred_element_type=jnp.float32) + b2_ref[...]
    out_ref[...] = (o * jax.nn.sigmoid(o)).astype(out_ref.dtype)


# --------------------------------------------------------------- param prep
def prepare_params(exponents, w1, b1, w2, b2, *, fast=False, dot_dtype=jnp.float32):
    """exponents: (half_dim,); w1: (n_channels, out_channels) (= torch weight.T);
    b1,b2: (out_channels,); w2: (out_channels, out_channels)."""
    half = exponents.reshape(-1).shape[0]
    exps = exponents.reshape(1, half).astype(jnp.float32)
    b1r = b1.reshape(1, -1).astype(jnp.float32)
    b2r = b2.reshape(1, -1).astype(jnp.float32)
    if fast:
        exp2 = jnp.concatenate([exps, exps], axis=-1)                 # (1, n_channels)
        phase = jnp.concatenate([jnp.zeros((1, half), jnp.float32),
                                 jnp.full((1, half), 0.5 * jnp.pi, jnp.float32)], axis=-1)
        return exp2, phase, w1.astype(dot_dtype), b1r, w2.astype(dot_dtype), b2r
    # rows [0:half) of W1 multiply sin(x); rows [half:) multiply cos(x)
    return (exps, w1[:half].astype(dot_dtype), w1[half:].astype(dot_dtype),
            b1r, w2.astype(dot_dtype), b2r)


# ------------------------------------------------------------------ wrapper
@functools.partial(jax.jit, static_argnames=("fast", "tile_b", "out_dtype"))
def diffusion_embedding(noise_level, scale, params, *, fast=False, tile_b=2048,
                        out_dtype=jnp.float32):
    """noise_level: (B,) or (B, 1) -> (B, out_channels)."""
    kernel = _diffemb_fast_kernel if fast else _diffemb_precise_kernel
    w2 = params[-2]
    out_channels = params[-1].shape[-1]

    # Fold scale into the noise column: (scale*noise)*exp matches the reference
    # association exactly (folding scale into the exponent table does not).
    noise = noise_level.reshape(-1, 1).astype(jnp.float32) * scale
    B = noise.shape[0]

    # Batch tile: multiple of the sublane packing, default 2048 (per-step overhead
    # <2%, tiles far below VMEM), capped at ceil(B/2) so the grid has >=2 steps
    # and the "parallel" batch axis can shard across both v7x TensorCores.
    align = SUBLANE_BF16 if w2.dtype == jnp.bfloat16 else SUBLANE_F32
    tb = min(int(tile_b), _round_up(pl.cdiv(B, 2), align))
    tb = _round_up(max(tb, align), align)
    b_pad = _round_up(B, tb)
    if b_pad != B:
        noise = jnp.pad(noise, ((0, b_pad - B), (0, 0)))

    resident = lambda p: pl.BlockSpec(p.shape, lambda i: (0, 0))   # stays in VMEM

    out = pl.pallas_call(
        kernel,
        out_shape=jax.ShapeDtypeStruct((b_pad, out_channels), out_dtype),
        grid=(b_pad // tb,),
        in_specs=[pl.BlockSpec((tb, 1), lambda i: (i, 0))] + [resident(p) for p in params],
        # Output block width == out_channels: no 128-lane pad, no post-kernel
        # column slice -> the kernel writes exactly the bytes the consumer reads.
        out_specs=pl.BlockSpec((tb, out_channels), lambda i: (i, 0)),
        compiler_params=pltpu.CompilerParams(dimension_semantics=("parallel",)),
    )(noise, *params)

    return out if b_pad == B else out[:B]


# ---------------------------------------------------------------- reference
def make_params(key, n_channels, out_channels):
    """Deterministic nn.Linear-style init (uniform(-1/sqrt(fan_in), 1/sqrt(fan_in)))."""
    k1, k2, k3, k4 = jax.random.split(key, 4)
    lim1 = 1.0 / math.sqrt(n_channels)
    lim2 = 1.0 / math.sqrt(out_channels)
    # stored transposed vs PyTorch nn.Linear: (in_features, out_features)
    w1 = jax.random.uniform(k1, (n_channels, out_channels), jnp.float32, -lim1, lim1)
    b1 = jax.random.uniform(k2, (out_channels,), jnp.float32, -lim1, lim1)
    w2 = jax.random.uniform(k3, (out_channels, out_channels), jnp.float32, -lim2, lim2)
    b2 = jax.random.uniform(k4, (out_channels,), jnp.float32, -lim2, lim2)
    return w1, b1, w2, b2


def reference(noise_level, exponents, w1, b1, w2, b2, scale):
    # Pure-JAX mirror of the PyTorch forward.  HIGHEST precision so the f32
    # matmuls are true f32 (TPU's default f32 matmul uses bf16 passes, which
    # would put ~1e-3 noise into the comparison against the f32 MXU kernel).
    hp = jax.lax.Precision.HIGHEST
    x = scale * noise_level.reshape(-1, 1) * exponents.reshape(1, -1)
    x = jnp.concatenate([jnp.sin(x), jnp.cos(x)], axis=-1)
    h = jnp.dot(x, w1, precision=hp) + b1
    h = h * jax.nn.sigmoid(h)
    o = jnp.dot(h, w2, precision=hp) + b2
    return o * jax.nn.sigmoid(o)


if __name__ == "__main__":
    pos_emb_channels = 32      # n_channels (even)
    pos_emb_scale = 50000.0
    pos_emb_dim = 64           # out_channels
    batch = 8

    half_dim = pos_emb_channels // 2
    exponents = 0.0001 ** (jnp.arange(half_dim, dtype=jnp.float32) / float(half_dim))

    key = jax.random.PRNGKey(0)
    kp, kn = jax.random.split(key)
    w1, b1, w2, b2 = make_params(kp, pos_emb_channels, pos_emb_dim)
    noise_level = jax.random.uniform(kn, (batch, 1), jnp.float32, 1e-4, 1.0)

    # ---- precise path (f32 operands everywhere) ------------------------------
    params = prepare_params(exponents, w1, b1, w2, b2, fast=False, dot_dtype=jnp.float32)
    out = jax.block_until_ready(diffusion_embedding(noise_level, pos_emb_scale, params))
    assert out.shape == (batch, pos_emb_dim) and out.dtype == jnp.float32

    # Realistic scale: sin/cos arguments reach ~5e4 where one f32 ulp is ~4e-3 rad,
    # so a few 1e-3 is the honest agreement floor between any two f32 trig paths.
    ref = reference(noise_level, exponents, w1, b1, w2, b2, pos_emb_scale)
    assert jnp.allclose(out, ref, atol=3e-2, rtol=3e-2), "mismatch vs reference (scale=5e4)"

    # Small-argument run removes that trig noise floor -> tight structural check.
    noise_small = noise_level * 1e-4          # sin/cos arguments <= ~5
    out_s = jax.block_until_ready(diffusion_embedding(noise_small, pos_emb_scale, params))
    ref_s = reference(noise_small, exponents, w1, b1, w2, b2, pos_emb_scale)
    assert jnp.allclose(out_s, ref_s, atol=1e-5, rtol=1e-5), "mismatch vs reference (small args)"

    # ---- fast path (single phase-shifted sin + bf16 dot operands + bf16 out) --
    # Approximation-level differences (sin(x+pi/2) vs cos(x) at |x|~5e4, bf16
    # operand rounding) make a tight allclose inappropriate here; the loose bound
    # still catches any structural/wiring bug, which would be O(0.5+).
    params_f = prepare_params(exponents, w1, b1, w2, b2, fast=True, dot_dtype=jnp.bfloat16)
    out_f = jax.block_until_ready(
        diffusion_embedding(noise_level, pos_emb_scale, params_f, fast=True,
                            out_dtype=jnp.bfloat16))
    assert out_f.shape == (batch, pos_emb_dim) and out_f.dtype == jnp.bfloat16
    diff = jnp.max(jnp.abs(out_f.astype(jnp.float32) - ref))
    assert bool(jnp.isfinite(diff)) and float(diff) < 0.25, "fast path sanity check failed"

    print("KERNEL_OK")
</pallas_src>

<mosaic_0001>
module attributes {stable_mosaic.version = 11 : i64} {
  func.func @_diffemb_precise_kernel(%arg0: i32, %arg1: memref<8x1xf32, #tpu.memory_space<vmem>>, %arg2: memref<1x16xf32, #tpu.memory_space<vmem>>, %arg3: memref<16x64xf32, #tpu.memory_space<vmem>>, %arg4: memref<16x64xf32, #tpu.memory_space<vmem>>, %arg5: memref<1x64xf32, #tpu.memory_space<vmem>>, %arg6: memref<64x64xf32, #tpu.memory_space<vmem>>, %arg7: memref<1x64xf32, #tpu.memory_space<vmem>>, %arg8: memref<8x64xf32, #tpu.memory_space<vmem>>) attributes {dimension_semantics = [#tpu.dimension_semantics<parallel>], iteration_bounds = array<i64: 1>, scalar_prefetch = 0 : i64, scratch_operands = 0 : i64, tpu.core_type = #tpu.core_type<tc>, window_params = [{transform_indices = @transform_0, window_bounds = array<i64: 8, 1>}, {pipeline_mode = #tpu.pipeline_mode<synchronous>, transform_indices = @transform_1, window_bounds = array<i64: 1, 16>}, {pipeline_mode = #tpu.pipeline_mode<synchronous>, transform_indices = @transform_2, window_bounds = array<i64: 16, 64>}, {pipeline_mode = #tpu.pipeline_mode<synchronous>, transform_indices = @transform_3, window_bounds = array<i64: 16, 64>}, {pipeline_mode = #tpu.pipeline_mode<synchronous>, transform_indices = @transform_4, window_bounds = array<i64: 1, 64>}, {pipeline_mode = #tpu.pipeline_mode<synchronous>, transform_indices = @transform_5, window_bounds = array<i64: 64, 64>}, {pipeline_mode = #tpu.pipeline_mode<synchronous>, transform_indices = @transform_6, window_bounds = array<i64: 1, 64>}, {transform_indices = @transform_7, window_bounds = array<i64: 8, 64>}]} {
    %c0 = arith.constant 0 : index
    %c0_0 = arith.constant 0 : index
    %0 = vector.load %arg1[%c0, %c0_0] : memref<8x1xf32, #tpu.memory_space<vmem>>, vector<8x1xf32>
    %c0_1 = arith.constant 0 : index
    %c0_2 = arith.constant 0 : index
    %1 = vector.load %arg2[%c0_1, %c0_2] : memref<1x16xf32, #tpu.memory_space<vmem>>, vector<1x16xf32>
    %2 = vector.broadcast %0 : vector<8x1xf32> to vector<8x16xf32>
    %3 = vector.broadcast %1 : vector<1x16xf32> to vector<8x16xf32>
    %4 = arith.mulf %2, %3 : vector<8x16xf32>
    %5 = math.sin %4 : vector<8x16xf32>
    %6 = math.cos %4 : vector<8x16xf32>
    %c0_3 = arith.constant 0 : index
    %c0_4 = arith.constant 0 : index
    %7 = vector.load %arg3[%c0_3, %c0_4] : memref<16x64xf32, #tpu.memory_space<vmem>>, vector<16x64xf32>
    %cst = arith.constant dense<0.000000e+00> : vector<8x64xf32>
    %8 = tpu.matmul %5, %7, %cst {dimension_numbers = #tpu.dot_dimension_numbers<[1], [0], [0], [1], [0, 0, 1, 1], [], []>} : vector<8x16xf32>, vector<16x64xf32>, vector<8x64xf32> -> vector<8x64xf32>
    %c0_5 = arith.constant 0 : index
    %c0_6 = arith.constant 0 : index
    %9 = vector.load %arg4[%c0_5, %c0_6] : memref<16x64xf32, #tpu.memory_space<vmem>>, vector<16x64xf32>
    %cst_7 = arith.constant dense<0.000000e+00> : vector<8x64xf32>
    %10 = tpu.matmul %6, %9, %cst_7 {dimension_numbers = #tpu.dot_dimension_numbers<[1], [0], [0], [1], [0, 0, 1, 1], [], []>} : vector<8x16xf32>, vector<16x64xf32>, vector<8x64xf32> -> vector<8x64xf32>
    %11 = arith.addf %8, %10 : vector<8x64xf32>
    %c0_8 = arith.constant 0 : index
    %c0_9 = arith.constant 0 : index
    %12 = vector.load %arg5[%c0_8, %c0_9] : memref<1x64xf32, #tpu.memory_space<vmem>>, vector<1x64xf32>
    %13 = vector.broadcast %12 : vector<1x64xf32> to vector<8x64xf32>
    %14 = arith.addf %11, %13 : vector<8x64xf32>
    %15 = arith.negf %14 : vector<8x64xf32>
    %16 = math.exp %15 : vector<8x64xf32>
    %cst_10 = arith.constant 1.000000e+00 : f32
    %17 = vector.broadcast %cst_10 : f32 to vector<8x64xf32>
    %18 = arith.addf %17, %16 : vector<8x64xf32>
    %19 = arith.divf %17, %18 : vector<8x64xf32>
    %20 = arith.mulf %14, %19 : vector<8x64xf32>
    %c0_11 = arith.constant 0 : index
    %c0_12 = arith.constant 0 : index
    %21 = vector.load %arg6[%c0_11, %c0_12] : memref<64x64xf32, #tpu.memory_space<vmem>>, vector<64x64xf32>
    %cst_13 = arith.constant dense<0.000000e+00> : vector<8x64xf32>
    %22 = tpu.matmul %20, %21, %cst_13 {dimension_numbers = #tpu.dot_dimension_numbers<[1], [0], [0], [1], [0, 0, 1, 1], [], []>} : vector<8x64xf32>, vector<64x64xf32>, vector<8x64xf32> -> vector<8x64xf32>
    %c0_14 = arith.constant 0 : index
    %c0_15 = arith.constant 0 : index
    %23 = vector.load %arg7[%c0_14, %c0_15] : memref<1x64xf32, #tpu.memory_space<vmem>>, vector<1x64xf32>
    %24 = vector.broadcast %23 : vector<1x64xf32> to vector<8x64xf32>
    %25 = arith.addf %22, %24 : vector<8x64xf32>
    %26 = arith.negf %25 : vector<8x64xf32>
    %27 = math.exp %26 : vector<8x64xf32>
    %cst_16 = arith.constant 1.000000e+00 : f32
    %28 = vector.broadcast %cst_16 : f32 to vector<8x64xf32>
    %29 = arith.addf %28, %27 : vector<8x64xf32>
    %30 = arith.divf %28, %29 : vector<8x64xf32>
    %31 = arith.mulf %25, %30 : vector<8x64xf32>
    %c0_17 = arith.constant 0 : index
    %c0_18 = arith.constant 0 : index
    %32 = vector.load %arg8[%c0_17, %c0_18] : memref<8x64xf32, #tpu.memory_space<vmem>>, vector<8x64xf32>
    tpu.vector_store %arg8[%c0_17, %c0_18], %31 {strides = array<i32>} : memref<8x64xf32, #tpu.memory_space<vmem>>, vector<8x64xf32>,
    return
  }
  func.func @transform_0(%arg0: i32) -> (i32, i32) {
    %c0_i32 = arith.constant 0 : i32
    %c0_i32_0 = arith.constant 0 : i32
    return %arg0, %c0_i32 : i32, i32
  }
  func.func @transform_1(%arg0: i32) -> (i32, i32) {
    %c0_i32 = arith.constant 0 : i32
    %c0_i32_0 = arith.constant 0 : i32
    %c0_i32_1 = arith.constant 0 : i32
    return %c0_i32, %c0_i32_0 : i32, i32
  }
  func.func @transform_2(%arg0: i32) -> (i32, i32) {
    %c0_i32 = arith.constant 0 : i32
    %c0_i32_0 = arith.constant 0 : i32
    %c0_i32_1 = arith.constant 0 : i32
    return %c0_i32, %c0_i32_0 : i32, i32
  }
  func.func @transform_3(%arg0: i32) -> (i32, i32) {
    %c0_i32 = arith.constant 0 : i32
    %c0_i32_0 = arith.constant 0 : i32
    %c0_i32_1 = arith.constant 0 : i32
    return %c0_i32, %c0_i32_0 : i32, i32
  }
  func.func @transform_4(%arg0: i32) -> (i32, i32) {
    %c0_i32 = arith.constant 0 : i32
    %c0_i32_0 = arith.constant 0 : i32
    %c0_i32_1 = arith.constant 0 : i32
    return %c0_i32, %c0_i32_0 : i32, i32
  }
  func.func @transform_5(%arg0: i32) -> (i32, i32) {
    %c0_i32 = arith.constant 0 : i32
    %c0_i32_0 = arith.constant 0 : i32
    %c0_i32_1 = arith.constant 0 : i32
    return %c0_i32, %c0_i32_0 : i32, i32
  }
  func.func @transform_6(%arg0: i32) -> (i32, i32) {
    %c0_i32 = arith.constant 0 : i32
    %c0_i32_0 = arith.constant 0 : i32
    %c0_i32_1 = arith.constant 0 : i32
    return %c0_i32, %c0_i32_0 : i32, i32
  }
  func.func @transform_7(%arg0: i32) -> (i32, i32) {
    %c0_i32 = arith.constant 0 : i32
    %c0_i32_0 = arith.constant 0 : i32
    return %arg0, %c0_i32 : i32, i32
  }
}

</mosaic_0001>

<llo_original>
// kernel: diffusion_embedding.1
$region0: #{diffusion_embedding.1}
  #allocation0 [shape = 'u32[]', space=smem, size = 0x4, offset = 0x4, fixed_abs, tag = 'smem constant byte address 0x4 - core index']
  #allocation1 [shape = 'u32[144,128]{1,0:T(1,128)}', space=vmem, size = 0x12000, scoped, tag = 'internal scratch']
  %s0 = inlined_call_operand.vmem [shape: f32[8,1], index: 0, kind: input, shape index: {}]
  %s1 = inlined_call_operand.vmem [shape: f32[1,16], index: 1, kind: input, shape index: {}]
  %s2 = inlined_call_operand.vmem [shape: f32[16,64], index: 2, kind: input, shape index: {}]
  %s3 = inlined_call_operand.vmem [shape: f32[16,64], index: 3, kind: input, shape index: {}]
  %s4 = inlined_call_operand.vmem [shape: f32[1,64], index: 4, kind: input, shape index: {}]
  %s5 = inlined_call_operand.hbm [shape: f32[64,64], index: 5, kind: input, shape index: {}]
  %s6 = inlined_call_operand.vmem [shape: f32[1,64], index: 6, kind: input, shape index: {}]
  %s7 = inlined_call_operand.hbm [shape: f32[8,64], index: 7, kind: output, shape index: {}]
  %s8 = sld [smem:[#allocation0]]
  $region42: #{diffusion_embedding.1} parent=0
    _
  %s10 = ssub.s32 1, %s8
  %s11 = scalar_select 0, %s10, %s8
  $region1: #{diffusion_embedding.1} parent=0
    #allocation2 [shape = 'u8[32768]{0}', space=vmem, size = 0x8000, scoped, tag = 'input window, operand 5, single buffered']
    #allocation3 [shape = 's32[1]{0}', space=sflag, size = 0x4, scoped, tag = 'scoped memory for diffusion_embedding.1']
    #allocation4 [shape = 's32[1]{0}', space=sflag, size = 0x4, scoped, tag = 'scoped memory for diffusion_embedding.1']
    #allocation5 [shape = 'u8[4096]{0}', space=vmem, size = 0x1000, scoped, tag = 'output window, operand 0, single buffered']
    %12 = vsyncpa [#allocation3], 0
    %13 = vsyncpa [#allocation4], 0
    // Predicated region
    $region2: #{diffusion_embedding.1} parent=1 // pred_check
      _
    $region3: #{diffusion_embedding.1} parent=1 // pred_check_branch
      %15 = sbr.rel (0) target = $region5
    $region4: #{diffusion_embedding.1} parent=1 // pred_region
      _
    $region5: #{diffusion_embedding.1} parent=1 // pred_fallthru
      _
    // Predicated region
    $region6: #{diffusion_embedding.1} parent=1 // pred_check
      _
    $region7: #{diffusion_embedding.1} parent=1 // pred_check_branch
      %17 = sbr.rel (0) target = $region9
    $region8: #{diffusion_embedding.1} parent=1 // pred_region
      _
    $region9: #{diffusion_embedding.1} parent=1 // pred_fallthru
      _
    // Predicated region
    $region10: #{diffusion_embedding.1} parent=1 // pred_check
      _
    $region11: #{diffusion_embedding.1} parent=1 // pred_check_branch
      %19 = sbr.rel (0) target = $region13
    $region12: #{diffusion_embedding.1} parent=1 // pred_region
      _
    $region13: #{diffusion_embedding.1} parent=1 // pred_fallthru
      _
    // Predicated region
    $region14: #{diffusion_embedding.1} parent=1 // pred_check
      _
    $region15: #{diffusion_embedding.1} parent=1 // pred_check_branch
      %21 = sbr.rel (0) target = $region17
    $region16: #{diffusion_embedding.1} parent=1 // pred_region
      _
    $region17: #{diffusion_embedding.1} parent=1 // pred_fallthru
      _
    // Predicated region
    $region18: #{diffusion_embedding.1} parent=1 // pred_check
      _
    $region19: #{diffusion_embedding.1} parent=1 // pred_check_branch
      %23 = sbr.rel (0) target = $region21
    $region20: #{diffusion_embedding.1} parent=1 // pred_region
      _
    $region21: #{diffusion_embedding.1} parent=1 // pred_fallthru
      _
    // Predicated region
    $region22: #{diffusion_embedding.1} parent=1 // pred_check
      _
    $region23: #{diffusion_embedding.1} parent=1 // pred_check_branch
      %25 = sbr.rel (0) target = $region25
    $region24: #{diffusion_embedding.1} parent=1 // pred_region
      %s27 = ssub.s32 1024, 1024
      %28 = vsyncadd [#allocation3], %s27
      %s29 = sshll.u32 [#allocation2], 4
      %s30 = int_to_ptr.vmem [resolvable:$true] %s29
      %35 = dma.hbm_to_vmem [thread:$0]  %s5, 1024, %s30, [#allocation3], 128, 128, 8
    $region25: #{diffusion_embedding.1} parent=1 // pred_fallthru
      _
    // Predicated region
    $region26: #{diffusion_embedding.1} parent=1 // pred_check
      _
    $region27: #{diffusion_embedding.1} parent=1 // pred_check_branch
      %37 = sbr.rel (0) target = $region29
    $region28: #{diffusion_embedding.1} parent=1 // pred_region
      _
    $region29: #{diffusion_embedding.1} parent=1 // pred_fallthru
      _
    // Predicated region
    $region30: #{diffusion_embedding.1} parent=1 // pred_check
      _
    $region31: #{diffusion_embedding.1} parent=1 // pred_check_branch
      %39 = sbr.rel (0) target = $region33
    $region32: #{diffusion_embedding.1} parent=1 // pred_region
      %40 = dma.done [#allocation3], 1024
    $region33: #{diffusion_embedding.1} parent=1 // pred_fallthru
      _
    %v41 = vld [vmem:[%s0] sm:$0xff]
    %v42 = vld [vmem:[%s1] sm:$0x1]
    %44 = vset.pattern.permute.xlu0 0
    %45 = vperm.xlu0 %44, %v41
    %v46 = vpop.permute.xlu0 %45
    %v49 = vlaneseq
    %v50 = vshrl.u32 %v49, 7
    %v51 = vsub.s32 0, %v50
    %v52 = vrot.slane %v42, %v51
    %v54 = vmul.f32 %v46, %v52
    %v55 = vand.u32 2147483647, %v54
    %vm56 = vcmp.le.f32.partialorder %v55, 0.7853982
    %vm57 = vcmp.lt.s32.totalorder %v54, 0
    %v58 = vand.u32 %v54, 2139095040
    %v59 = vshrl.u32 %v58, 23
    %v60 = vsub.s32 %v59, 127
    %v61 = vand.u32 2147483647, %v54
    %v62 = vand.u32 %v61, 8388607
    %v63 = vor.u32 %v62, 8388608
    %v64 = vsub.s32 0, %v63
    %v65 = vadd.s32 %v60, 1
    %vm66 = vcmp.gt.s32.totalorder %v65, 0
    %v67 = vsel %vm66, %v65, 0
    %v68 = vshrl.u32 %v67, 5
    %v69 = vand.u32 %v67, 31
    %v70 = vsub.s32 32, %v69
    %v71 = vshrl.u32 683565275, %v70
    %v72 = vshll.u32 683565275, %v69
    %v73 = vshrl.u32 2475754826, %v70
    %v74 = vor.u32 %v72, %v73
    %v75 = vshll.u32 2475754826, %v69
    %v76 = vshrl.u32 2131351028, %v70
    %v77 = vor.u32 %v75, %v76
    %v78 = vshll.u32 2131351028, %v69
    %v79 = vshrl.u32 2102212464, %v70
    %v80 = vor.u32 %v78, %v79
    %v81 = vshll.u32 2102212464, %v69
    %v82 = vshrl.u32 920167782, %v70
    %v83 = vor.u32 %v81, %v82
    %v84 = vshll.u32 920167782, %v69
    %v85 = vshrl.u32 1326507024, %v70
    %v86 = vor.u32 %v84, %v85
    %vm87 = vcmp.lt.s32.totalorder %v68, 1
    %vm88 = vcmp.lt.s32.totalorder %v68, 2
    %vm89 = vcmp.lt.s32.totalorder %v68, 3
    %vm90 = vcmp.lt.s32.totalorder %v68, 4
    %v91 = vsel %vm87, %v71, %v74
    %v92 = vsel %vm90, %v80, 2102212464
    %v93 = vsel %vm89, %v77, %v92
    %v94 = vsel %vm88, %v91, %v93
    %v95 = vsel %vm87, %v74, %v77
    %v96 = vsel %vm90, %v83, 920167782
    %v97 = vsel %vm89, %v80, %v96
    %v98 = vsel %vm88, %v95, %v97
    %v99 = vsel %vm87, %v77, %v80
    %v100 = vsel %vm90, %v86, 1326507024
    %v101 = vsel %vm89, %v83, %v100
    %v102 = vsel %vm88, %v99, %v101
    %v103 = vshll.u32 %v63, 8
    %v104 = vmul.u32.u64.compose %v103, %v102
    %v105 = vextract.low.u32 %v104
    %v106 = vextract.high.u32 %v104
    %v107 = vmul.u32.u64.compose %v103, %v98
    %v108 = vextract.low.u32 %v107
    %v109 = vextract.high.u32 %v107
    %v110 = vmul.u32 %v103, %v94
    %v111 = vadd.s32 %v106, %v108
    %vm112 = vc.u32 %v106, %v108
    %v113 = vadd.s32 %v109, 1
    %v114 = vsel %vm112, %v113, %v109
    %v115 = vadd.s32 %v110, %v114
    %v116 = vadd.s32 %v115, 536870912
    %v117 = vshrl.u32 %v116, 30
    %v118 = vshll.u32 %v117, 30
    %v119 = vsub.s32 %v115, %v118
    %vm120 = vcmp.lt.s32.totalorder %v119, 0
    %v121 = vsub.s32 0, %v119
    %v122 = vsel %vm120, %v121, %v119
    %v123 = vclz %v122
    %v124 = vsub.s32 %v123, 2
    %vm125 = vcmp.gt.s32.totalorder 0, %v124
    %v126 = vsel %vm125, 0, %v124
    %v127 = vsub.s32 32, %v126
    %v128 = vshll.u32 %v119, %v126
    %v129 = vshrl.u32 %v111, %v127
    %v130 = vor.u32 %v128, %v129
    %v131 = vsub.s32 4294967266, %v126
    %v132 = vadd.s32 %v131, 127
    %v133 = vshll.u32 %v132, 23
    %v134 = vor.u32 4788187, %v133
    %v135 = vand.u32 2147483647, %v134
    %v137 = vcvt.s32.f32 %v130
    %v138 = vmul.f32 %v137, %v135
    %v139 = vxor.u32 %v138, 2147483648
    %v140 = vsel %vm57, %v139, %v138
    %v141 = vsub.s32 4, %v117
    %v142 = vsel %vm57, %v141, %v117
    %v143 = vsel %vm56, %v54, %v140
    %v144 = vsel %vm56, 0, %v142
    %v145 = vcosq.f32.pop %v143
    %v146 = vsinq.f32.pop %v143
    %vm147 = vweird.f32 %v54
    %v148 = vadd.s32 %v144, 3
    %v149 = vand.u32 %v148, 3
    %vm150 = vcmp.lt.s32.totalorder %v149, 2
    %vm151 = vcmp.eq.s32.totalorder %v149, 0
    %v152 = vxor.u32 %v146, 2147483648
    %v153 = vsel %vm151, %v145, %v152
    %vm154 = vcmp.eq.s32.totalorder %v149, 2
    %v155 = vxor.u32 %v145, 2147483648
    %v156 = vsel %vm154, %v155, %v146
    %v157 = vsel %vm150, %v153, %v156
    %v158 = vsel %vm147, nan, %v157
    %v159 = vand.u32 2147483647, %v54
    %vm160 = vcmp.le.f32.partialorder %v159, 0.7853982
    %vm161 = vcmp.lt.s32.totalorder %v54, 0
    %v162 = vand.u32 %v54, 2139095040
    %v163 = vshrl.u32 %v162, 23
    %v164 = vsub.s32 %v163, 127
    %v165 = vand.u32 2147483647, %v54
    %v166 = vand.u32 %v165, 8388607
    %v167 = vor.u32 %v166, 8388608
    %v168 = vsub.s32 0, %v167
    %v169 = vadd.s32 %v164, 1
    %vm170 = vcmp.gt.s32.totalorder %v169, 0
    %v171 = vsel %vm170, %v169, 0
    %v172 = vshrl.u32 %v171, 5
    %v173 = vand.u32 %v171, 31
    %v174 = vsub.s32 32, %v173
    %v175 = vshrl.u32 683565275, %v174
    %v176 = vshll.u32 683565275, %v173
    %v177 = vshrl.u32 2475754826, %v174
    %v178 = vor.u32 %v176, %v177
    %v179 = vshll.u32 2475754826, %v173
    %v180 = vshrl.u32 2131351028, %v174
    %v181 = vor.u32 %v179, %v180
    %v182 = vshll.u32 2131351028, %v173
    %v183 = vshrl.u32 2102212464, %v174
    %v184 = vor.u32 %v182, %v183
    %v185 = vshll.u32 2102212464, %v173
    %v186 = vshrl.u32 920167782, %v174
    %v187 = vor.u32 %v185, %v186
    %v188 = vshll.u32 920167782, %v173
    %v189 = vshrl.u32 1326507024, %v174
    %v190 = vor.u32 %v188, %v189
    %vm191 = vcmp.lt.s32.totalorder %v172, 1
    %vm192 = vcmp.lt.s32.totalorder %v172, 2
    %vm193 = vcmp.lt.s32.totalorder %v172, 3
    %vm194 = vcmp.lt.s32.totalorder %v172, 4
    %v195 = vsel %vm191, %v175, %v178
    %v196 = vsel %vm194, %v184, 2102212464
    %v197 = vsel %vm193, %v181, %v196
    %v198 = vsel %vm192, %v195, %v197
    %v199 = vsel %vm191, %v178, %v181
    %v200 = vsel %vm194, %v187, 920167782
    %v201 = vsel %vm193, %v184, %v200
    %v202 = vsel %vm192, %v199, %v201
    %v203 = vsel %vm191, %v181, %v184
    %v204 = vsel %vm194, %v190, 1326507024
    %v205 = vsel %vm193, %v187, %v204
    %v206 = vsel %vm192, %v203, %v205
    %v207 = vshll.u32 %v167, 8
    %v208 = vmul.u32.u64.compose %v207, %v206
    %v209 = vextract.low.u32 %v208
    %v210 = vextract.high.u32 %v208
    %v211 = vmul.u32.u64.compose %v207, %v202
    %v212 = vextract.low.u32 %v211
    %v213 = vextract.high.u32 %v211
    %v214 = vmul.u32 %v207, %v198
    %v215 = vadd.s32 %v210, %v212
    %vm216 = vc.u32 %v210, %v212
    %v217 = vadd.s32 %v213, 1
    %v218 = vsel %vm216, %v217, %v213
    %v219 = vadd.s32 %v214, %v218
    %v220 = vadd.s32 %v219, 536870912
    %v221 = vshrl.u32 %v220, 30
    %v222 = vshll.u32 %v221, 30
    %v223 = vsub.s32 %v219, %v222
    %vm224 = vcmp.lt.s32.totalorder %v223, 0
    %v225 = vsub.s32 0, %v223
    %v226 = vsel %vm224, %v225, %v223
    %v227 = vclz %v226
    %v228 = vsub.s32 %v227, 2
    %vm229 = vcmp.gt.s32.totalorder 0, %v228
    %v230 = vsel %vm229, 0, %v228
    %v231 = vsub.s32 32, %v230
    %v232 = vshll.u32 %v223, %v230
    %v233 = vshrl.u32 %v215, %v231
    %v234 = vor.u32 %v232, %v233
    %v235 = vsub.s32 4294967266, %v230
    %v236 = vadd.s32 %v235, 127
    %v237 = vshll.u32 %v236, 23
    %v238 = vor.u32 4788187, %v237
    %v239 = vand.u32 2147483647, %v238
    %v241 = vcvt.s32.f32 %v234
    %v242 = vmul.f32 %v241, %v239
    %v243 = vxor.u32 %v242, 2147483648
    %v244 = vsel %vm161, %v243, %v242
    %v245 = vsub.s32 4, %v221
    %v246 = vsel %vm161, %v245, %v221
    %v247 = vsel %vm160, %v54, %v244
    %v248 = vsel %vm160, 0, %v246
    %v249 = vcosq.f32.pop %v247
    %v250 = vsinq.f32.pop %v247
    %vm251 = vweird.f32 %v54
    %v252 = vand.u32 %v248, 3
    %vm253 = vcmp.lt.s32.totalorder %v252, 2
    %vm254 = vcmp.eq.s32.totalorder %v252, 0
    %v255 = vxor.u32 %v250, 2147483648
    %v256 = vsel %vm254, %v249, %v255
    %vm257 = vcmp.eq.s32.totalorder %v252, 2
    %v258 = vxor.u32 %v249, 2147483648
    %v259 = vsel %vm257, %v258, %v250
    %v260 = vsel %vm253, %v256, %v259
    %v261 = vsel %vm251, nan, %v260
    %v262 = vld [vmem:[%s2] sm:$0xff]
    %v263 = vld [vmem:[%s2 + $0x8] sm:$0xff]
    %v264 = vld [vmem:[%s3] sm:$0xff]
    %v265 = vld [vmem:[%s3 + $0x8] sm:$0xff]
    %vm266 = vcmask 130048
    %v268 = vsel %vm266, %v261, 0
    %270 = vmatprep.subr.mxu0 0.0
    %271 = vmatpush1.msra.mxu0 %v264
    %272 = vmatprep.subr.mxu0 0.0
    %273 = vmatpush1.msra.mxu0 %v265
    %274 = vmatprep.subr.mxu0 0.0
    %275 = vmatpush1.msra.mxu0 0.0
    %276 = vmatprep.subr.mxu0 0.0
    %277 = vmatpush1.msra.mxu0 0.0
    %278 = vmatprep.subr.mxu0 0.0
    %279 = vmatpush1.msra.mxu0 0.0
    %280 = vmatprep.subr.mxu0 0.0
    %281 = vmatpush1.msra.mxu0 0.0
    %282 = vmatprep.subr.mxu0 0.0
    %283 = vmatpush1.msra.mxu0 0.0
    %284 = vmatprep.subr.mxu0 0.0
    %285 = vmatpush1.msra.mxu0 0.0
    %286 = vmatprep.subr.mxu0 0.0
    %287 = vmatpush1.msra.mxu0 0.0
    %288 = vmatprep.subr.mxu0 0.0
    %289 = vmatpush1.msra.mxu0 0.0
    %290 = vmatprep.subr.mxu0 0.0
    %291 = vmatpush1.msra.mxu0 0.0
    %292 = vmatprep.subr.mxu0 0.0
    %293 = vmatpush1.msra.mxu0 0.0
    %294 = vmatprep.subr.mxu0 0.0
    %295 = vmatpush1.msra.mxu0 0.0
    %296 = vmatprep.subr.mxu0 0.0
    %297 = vmatpush1.msra.mxu0 0.0
    %298 = vmatprep.subr.mxu0 0.0
    %299 = vmatpush1.msra.mxu0 0.0
    %300 = vmatprep.subr.mxu0 0.0
    %301 = vmatpush1.msra.mxu0 0.0
    %302 = vmatprep.subr.mxu0 0.0
    %303 = vmatpush1.msra.mxu0 0.0
    %304 = vmatprep.subr.mxu0 0.0
    %305 = vmatpush1.msra.mxu0 0.0
    %306 = vmatprep.subr.mxu0 0.0
    %307 = vmatpush1.msra.mxu0 0.0
    %308 = vmatprep.subr.mxu0 0.0
    %309 = vmatpush1.msra.mxu0 0.0
    %310 = vmatprep.subr.mxu0 0.0
    %311 = vmatpush1.msra.mxu0 0.0
    %312 = vmatprep.subr.mxu0 0.0
    %313 = vmatpush1.msra.mxu0 0.0
    %314 = vmatprep.subr.mxu0 0.0
    %315 = vmatpush1.msra.mxu0 0.0
    %316 = vmatprep.subr.mxu0 0.0
    %317 = vmatpush1.msra.mxu0 0.0
    %318 = vmatprep.subr.mxu0 0.0
    %319 = vmatpush1.msra.mxu0 0.0
    %320 = vmatprep.subr.mxu0 0.0
    %321 = vmatpush1.msra.mxu0 0.0
    %322 = vmatprep.subr.mxu0 0.0
    %323 = vmatpush1.msra.mxu0 0.0
    %324 = vmatprep.subr.mxu0 0.0
    %325 = vmatpush1.msra.mxu0 0.0
    %326 = vmatprep.subr.mxu0 0.0
    %327 = vmatpush1.msra.mxu0 0.0
    %328 = vmatprep.subr.mxu0 0.0
    %329 = vmatpush1.msra.mxu0 0.0
    %330 = vmatprep.subr.mxu0 0.0
    %331 = vmatpush1.msra.mxu0 0.0
    %332 = vmatprep.subr.mxu0 0.0
    %333 = vmatpush1.msra.mxu0 0.0
    %334 = vmatprep.mubr.f32.mxu0 0.0
    %335 = vmatmul.mubr.f32.gmra.mrb[0].mxu0 %v268
    %v336 = vpop.f32.mrb[0].mxu0
    %v337 = vadd.f32 0.0, %v336
    %v338 = vpop.f32.mrb[0].mxu0
    %339 = vdwg.mxu0
    %v341 = vsel %vm266, %v158, 0
    %343 = vmatprep.subr.mxu0 0.0
    %344 = vmatpush1.msra.mxu0 %v262
    %345 = vmatprep.subr.mxu0 0.0
    %346 = vmatpush1.msra.mxu0 %v263
    %347 = vmatprep.subr.mxu0 0.0
    %348 = vmatpush1.msra.mxu0 0.0
    %349 = vmatprep.subr.mxu0 0.0
    %350 = vmatpush1.msra.mxu0 0.0
    %351 = vmatprep.subr.mxu0 0.0
    %352 = vmatpush1.msra.mxu0 0.0
    %353 = vmatprep.subr.mxu0 0.0
    %354 = vmatpush1.msra.mxu0 0.0
    %355 = vmatprep.subr.mxu0 0.0
    %356 = vmatpush1.msra.mxu0 0.0
    %357 = vmatprep.subr.mxu0 0.0
    %358 = vmatpush1.msra.mxu0 0.0
    %359 = vmatprep.subr.mxu0 0.0
    %360 = vmatpush1.msra.mxu0 0.0
    %361 = vmatprep.subr.mxu0 0.0
    %362 = vmatpush1.msra.mxu0 0.0
    %363 = vmatprep.subr.mxu0 0.0
    %364 = vmatpush1.msra.mxu0 0.0
    %365 = vmatprep.subr.mxu0 0.0
    %366 = vmatpush1.msra.mxu0 0.0
    %367 = vmatprep.subr.mxu0 0.0
    %368 = vmatpush1.msra.mxu0 0.0
    %369 = vmatprep.subr.mxu0 0.0
    %370 = vmatpush1.msra.mxu0 0.0
    %371 = vmatprep.subr.mxu0 0.0
    %372 = vmatpush1.msra.mxu0 0.0
    %373 = vmatprep.subr.mxu0 0.0
    %374 = vmatpush1.msra.mxu0 0.0
    %375 = vmatprep.subr.mxu0 0.0
    %376 = vmatpush1.msra.mxu0 0.0
    %377 = vmatprep.subr.mxu0 0.0
    %378 = vmatpush1.msra.mxu0 0.0
    %379 = vmatprep.subr.mxu0 0.0
    %380 = vmatpush1.msra.mxu0 0.0
    %381 = vmatprep.subr.mxu0 0.0
    %382 = vmatpush1.msra.mxu0 0.0
    %383 = vmatprep.subr.mxu0 0.0
    %384 = vmatpush1.msra.mxu0 0.0
    %385 = vmatprep.subr.mxu0 0.0
    %386 = vmatpush1.msra.mxu0 0.0
    %387 = vmatprep.subr.mxu0 0.0
    %388 = vmatpush1.msra.mxu0 0.0
    %389 = vmatprep.subr.mxu0 0.0
    %390 = vmatpush1.msra.mxu0 0.0
    %391 = vmatprep.subr.mxu0 0.0
    %392 = vmatpush1.msra.mxu0 0.0
    %393 = vmatprep.subr.mxu0 0.0
    %394 = vmatpush1.msra.mxu0 0.0
    %395 = vmatprep.subr.mxu0 0.0
    %396 = vmatpush1.msra.mxu0 0.0
    %397 = vmatprep.subr.mxu0 0.0
    %398 = vmatpush1.msra.mxu0 0.0
    %399 = vmatprep.subr.mxu0 0.0
    %400 = vmatpush1.msra.mxu0 0.0
    %401 = vmatprep.subr.mxu0 0.0
    %402 = vmatpush1.msra.mxu0 0.0
    %403 = vmatprep.subr.mxu0 0.0
    %404 = vmatpush1.msra.mxu0 0.0
    %405 = vmatprep.subr.mxu0 0.0
    %406 = vmatpush1.msra.mxu0 0.0
    %407 = vmatprep.mubr.f32.mxu0 0.0
    %408 = vmatmul.mubr.f32.gmra.mrb[0].mxu0 %v341
    %v409 = vpop.f32.mrb[0].mxu0
    %v410 = vadd.f32 %v337, %v409
    %v411 = vpop.f32.mrb[0].mxu0
    %412 = vdwg.mxu0
    %v413 = vld [vmem:[%s4] sm:$0x1]
    %v415 = vlaneseq
    %v416 = vshrl.u32 %v415, 7
    %v417 = vsub.s32 0, %v416
    %v418 = vrot.slane %v413, %v417
    %v420 = vadd.f32 %v410, %v418
    %v421 = vxor.u32 %v420, 2147483648
    %v422 = vmul.f32 %v421, 1.442695
    %v423 = vpow.pop %v422
    %v424 = vadd.f32 %v423, 1.0
    %v425 = vrcp.pop %v424
    %v426 = vmul.f32 1.0, %v425
    %v427 = vmul.f32 %v420, %v426
    %v428 = vld [vmem:[#allocation2] sm:$0xff]
    %v429 = vld [vmem:[#allocation2 + $0x8] sm:$0xff]
    %v430 = vld [vmem:[#allocation2 + $0x10] sm:$0xff]
    %v431 = vld [vmem:[#allocation2 + $0x18] sm:$0xff]
    %v432 = vld [vmem:[#allocation2 + $0x20] sm:$0xff]
    %v433 = vld [vmem:[#allocation2 + $0x28] sm:$0xff]
    %v434 = vld [vmem:[#allocation2 + $0x30] sm:$0xff]
    %v435 = vld [vmem:[#allocation2 + $0x38] sm:$0xff]
    %v436 = vld [vmem:[%s6] sm:$0x1]
    %v438 = vlaneseq
    %v439 = vshrl.u32 %v438, 7
    %v440 = vsub.s32 0, %v439
    %v441 = vrot.slane %v436, %v440
    %vm443 = vcmask 523264
    %v445 = vsel %vm443, %v427, 0
    %447 = vmatprep.subr.mxu0 0.0
    %448 = vmatpush1.msra.mxu0 %v428
    %449 = vmatprep.subr.mxu0 0.0
    %450 = vmatpush1.msra.mxu0 %v429
    %451 = vmatprep.subr.mxu0 0.0
    %452 = vmatpush1.msra.mxu0 %v430
    %453 = vmatprep.subr.mxu0 0.0
    %454 = vmatpush1.msra.mxu0 %v431
    %455 = vmatprep.subr.mxu0 0.0
    %456 = vmatpush1.msra.mxu0 %v432
    %457 = vmatprep.subr.mxu0 0.0
    %458 = vmatpush1.msra.mxu0 %v433
    %459 = vmatprep.subr.mxu0 0.0
    %460 = vmatpush1.msra.mxu0 %v434
    %461 = vmatprep.subr.mxu0 0.0
    %462 = vmatpush1.msra.mxu0 %v435
    %463 = vmatprep.subr.mxu0 0.0
    %464 = vmatpush1.msra.mxu0 0.0
    %465 = vmatprep.subr.mxu0 0.0
    %466 = vmatpush1.msra.mxu0 0.0
    %467 = vmatprep.subr.mxu0 0.0
    %468 = vmatpush1.msra.mxu0 0.0
    %469 = vmatprep.subr.mxu0 0.0
    %470 = vmatpush1.msra.mxu0 0.0
    %471 = vmatprep.subr.mxu0 0.0
    %472 = vmatpush1.msra.mxu0 0.0
    %473 = vmatprep.subr.mxu0 0.0
    %474 = vmatpush1.msra.mxu0 0.0
    %475 = vmatprep.subr.mxu0 0.0
    %476 = vmatpush1.msra.mxu0 0.0
    %477 = vmatprep.subr.mxu0 0.0
    %478 = vmatpush1.msra.mxu0 0.0
    %479 = vmatprep.subr.mxu0 0.0
    %480 = vmatpush1.msra.mxu0 0.0
    %481 = vmatprep.subr.mxu0 0.0
    %482 = vmatpush1.msra.mxu0 0.0
    %483 = vmatprep.subr.mxu0 0.0
    %484 = vmatpush1.msra.mxu0 0.0
    %485 = vmatprep.subr.mxu0 0.0
    %486 = vmatpush1.msra.mxu0 0.0
    %487 = vmatprep.subr.mxu0 0.0
    %488 = vmatpush1.msra.mxu0 0.0
    %489 = vmatprep.subr.mxu0 0.0
    %490 = vmatpush1.msra.mxu0 0.0
    %491 = vmatprep.subr.mxu0 0.0
    %492 = vmatpush1.msra.mxu0 0.0
    %493 = vmatprep.subr.mxu0 0.0
    %494 = vmatpush1.msra.mxu0 0.0
    %495 = vmatprep.subr.mxu0 0.0
    %496 = vmatpush1.msra.mxu0 0.0
    %497 = vmatprep.subr.mxu0 0.0
    %498 = vmatpush1.msra.mxu0 0.0
    %499 = vmatprep.subr.mxu0 0.0
    %500 = vmatpush1.msra.mxu0 0.0
    %501 = vmatprep.subr.mxu0 0.0
    %502 = vmatpush1.msra.mxu0 0.0
    %503 = vmatprep.subr.mxu0 0.0
    %504 = vmatpush1.msra.mxu0 0.0
    %505 = vmatprep.subr.mxu0 0.0
    %506 = vmatpush1.msra.mxu0 0.0
    %507 = vmatprep.subr.mxu0 0.0
    %508 = vmatpush1.msra.mxu0 0.0
    %509 = vmatprep.subr.mxu0 0.0
    %510 = vmatpush1.msra.mxu0 0.0
    %511 = vmatprep.mubr.f32.mxu0 0.0
    %512 = vmatmul.mubr.f32.gmra.mrb[0].mxu0 %v445
    %v513 = vpop.f32.mrb[0].mxu0
    %v514 = vadd.f32 %v441, %v513
    %v515 = vpop.f32.mrb[0].mxu0
    %516 = vdwg.mxu0
    %v517 = vxor.u32 %v514, 2147483648
    %v518 = vmul.f32 %v517, 1.442695
    %v519 = vpow.pop %v518
    %v520 = vadd.f32 %v519, 1.0
    %v521 = vrcp.pop %v520
    %v522 = vmul.f32 1.0, %v521
    %v523 = vmul.f32 %v514, %v522
    %524 = vst.msk [vmem:[#allocation5] sm:$0xff] %vm443, %v523
    // Predicated region
    $region34: #{diffusion_embedding.1} parent=1 // pred_check
      _
    $region35: #{diffusion_embedding.1} parent=1 // pred_check_branch
      %526 = sbr.rel (0) target = $region37
    $region36: #{diffusion_embedding.1} parent=1 // pred_region
      %s528 = ssub.s32 128, 128
      %529 = vsyncadd [#allocation4], %s528
      %s531 = sshll.u32 [#allocation5], 4
      %s532 = int_to_ptr.vmem [resolvable:$true] %s531
      %534 = dma.vmem_to_hbm [thread:$0]  %s532, 128, %s7, [#allocation4]
    $region37: #{diffusion_embedding.1} parent=1 // pred_fallthru
      _
    // Predicated region
    $region38: #{diffusion_embedding.1} parent=1 // pred_check
      _
    $region39: #{diffusion_embedding.1} parent=1 // pred_check_branch
      %536 = sbr.rel (0) target = $region41
    $region40: #{diffusion_embedding.1} parent=1 // pred_region
      %537 = dma.done [#allocation4], 128
    $region41: #{diffusion_embedding.1} parent=1 // pred_fallthru
      _
    %538 = vsyncpa [#allocation3], 1
    %539 = vsyncpa [#allocation4], 1

</llo_original>
